<compile_context>
chip_gen: v7x
topology: tpu7x:2x2x1
jax: 0.10.0
libtpu: 0.0.40
codegen_flags: <defaults>
</compile_context>

<pallas_src>
import functools

import jax
import jax.numpy as jnp
from jax.experimental import pallas as pl
from jax.experimental.pallas import tpu as pltpu

H1, H2, H3 = 128, 256, 512          # hidden sizes fixed by the PyTorch module
_LEAKY_SLOPE = 0.2                  # F.leaky_relu(x, 0.2) in the original forward
_LANE = 128


def _leaky_relu(x, slope=_LEAKY_SLOPE):
    return jnp.where(x > 0, x, slope * x)


def _round_up(n, m):
    return -(-n // m) * m


def generator_kernel(x_ref,
                     w1_ref, b1_ref,
                     w2_ref, b2_ref,
                     w3_ref, b3_ref,
                     w4_ref, b4_ref,
                     o_ref):
    """Entire 4-layer MLP for one batch tile; bf16 MXU operands, f32 accumulation."""
    h = jnp.dot(x_ref[...], w1_ref[...],
                preferred_element_type=jnp.float32) + b1_ref[...]
    h = _leaky_relu(h).astype(jnp.bfloat16)

    h = jnp.dot(h, w2_ref[...],
                preferred_element_type=jnp.float32) + b2_ref[...]
    h = _leaky_relu(h).astype(jnp.bfloat16)

    h = jnp.dot(h, w3_ref[...],
                preferred_element_type=jnp.float32) + b3_ref[...]
    h = _leaky_relu(h).astype(jnp.bfloat16)

    h = jnp.dot(h, w4_ref[...],
                preferred_element_type=jnp.float32) + b4_ref[...]
    o_ref[...] = jnp.tanh(h).astype(o_ref.dtype)


def prepare_params(params):
    """One-time (hoisted out of the per-call path): cast weights to bf16, biases to
    f32, and zero-pad w1's input rows so layer-1 K is lane-dense (multiple of 128)."""
    d_in = params["w1"].shape[0]
    d_in_pad = _round_up(d_in, _LANE)
    w1 = params["w1"].astype(jnp.bfloat16)
    if d_in_pad != d_in:
        w1 = jnp.pad(w1, ((0, d_in_pad - d_in), (0, 0)))
    prepared = {
        "w1": w1,
        "w2": params["w2"].astype(jnp.bfloat16),
        "w3": params["w3"].astype(jnp.bfloat16),
        "w4": params["w4"].astype(jnp.bfloat16),
        "b1": params["b1"].astype(jnp.float32),
        "b2": params["b2"].astype(jnp.float32),
        "b3": params["b3"].astype(jnp.float32),
        "b4": params["b4"].astype(jnp.float32),
    }
    return jax.device_put(prepared)


def _choose_tiling(B, max_tile):
    """Single grid step when the whole (padded) batch fits the tile cap; otherwise
    the smallest EVEN number of steps (v7x 2-TC friendly) with the smallest
    sublane-aligned tile that covers B (bounds padded-row waste)."""
    if B <= max_tile:
        return max(8, _round_up(B, 8)), 1
    n = 2
    while _round_up(pl.cdiv(B, n), 8) > max_tile:
        n += 2
    return _round_up(pl.cdiv(B, n), 8), n


@functools.partial(jax.jit, static_argnames=("out_dtype", "max_tile", "core_parallel"))
def generator_forward(x, prepared, *, out_dtype=jnp.float32, max_tile=2048,
                      core_parallel=False):
    """x: (B, input_size) float32. prepared: output of prepare_params()."""
    B, d_in = x.shape
    d_in_pad = prepared["w1"].shape[0]
    d_out = prepared["w4"].shape[1]

    tb, n_steps = _choose_tiling(B, max_tile)
    B_pad = tb * n_steps

    xb = x.astype(jnp.bfloat16)
    if B_pad != B or d_in_pad != d_in:
        # Batch pad and lane pad fused into a single op; sliced off on return.
        xb = jnp.pad(xb, ((0, B_pad - B), (0, d_in_pad - d_in)))

    mxu_terms = d_in_pad * H1 + H1 * H2 + H2 * H3 + H3 * d_out
    cost = pl.CostEstimate(
        flops=2 * B_pad * mxu_terms,
        transcendentals=B_pad * d_out,                       # tanh epilogue
        bytes_accessed=(2 * B_pad * d_in_pad                 # bf16 x
                        + 2 * mxu_terms                      # bf16 weights
                        + 4 * (H1 + H2 + H3 + d_out)         # f32 biases
                        + jnp.dtype(out_dtype).itemsize * B_pad * d_out),
    )

    # On v7x (2 TensorCores) set core_parallel=True; elsewhere plain "parallel".
    sem = (pltpu.CORE_PARALLEL,) if core_parallel else ("parallel",)

    # Resident (constant index_map) weights/biases; Pallas skips re-DMA across steps.
    # (Could also be single-buffered via pipeline_mode=pl.Buffered(1) to save ~0.6 MiB
    #  of VMEM on v7x if tiles are pushed beyond the default cap.)
    full = lambda shape: pl.BlockSpec(shape, lambda i: (0, 0))

    out = pl.pallas_call(
        generator_kernel,
        out_shape=jax.ShapeDtypeStruct((B_pad, d_out), out_dtype),
        grid_spec=pltpu.PrefetchScalarGridSpec(
            num_scalar_prefetch=0,
            grid=(n_steps,),
            in_specs=[
                pl.BlockSpec((tb, d_in_pad), lambda i: (i, 0)),   # x tile (streamed)
                full((d_in_pad, H1)), full((1, H1)),              # fc1 (resident)
                full((H1, H2)), full((1, H2)),                    # fc2 (resident)
                full((H2, H3)), full((1, H3)),                    # fc3 (resident)
                full((H3, d_out)), full((1, d_out)),              # fc4 (resident)
            ],
            out_specs=pl.BlockSpec((tb, d_out), lambda i: (i, 0)),
        ),
        compiler_params=pltpu.CompilerParams(
            dimension_semantics=sem,
            vmem_limit_bytes=32 * 1024 * 1024,
        ),
        cost_estimate=cost,
    )(xb, prepared["w1"], prepared["b1"], prepared["w2"], prepared["b2"],
      prepared["w3"], prepared["b3"], prepared["w4"], prepared["b4"])

    return out[:B]


def init_params(key, input_size, output_size):
    """Deterministic synthetic init (nn.Linear shapes, stored transposed)."""
    dims = [(input_size, H1), (H1, H2), (H2, H3), (H3, output_size)]
    params = {}
    for idx, (din, dout) in enumerate(dims, start=1):
        key, kw, kb = jax.random.split(key, 3)
        bound = 1.0 / jnp.sqrt(din)
        params[f"w{idx}"] = jax.random.uniform(
            kw, (din, dout), jnp.float32, -bound, bound)
        params[f"b{idx}"] = jax.random.uniform(
            kb, (1, dout), jnp.float32, -bound, bound)
    return params


def generator_ref(x, params):
    """Pure-JAX f32 reference for correctness checks."""
    h = x
    for idx in range(1, 5):
        h = jnp.dot(h, params[f"w{idx}"]) + params[f"b{idx}"]
        if idx < 4:
            h = jnp.where(h > 0, h, _LEAKY_SLOPE * h)
        else:
            h = jnp.tanh(h)
    return h


if __name__ == "__main__":
    key = jax.random.PRNGKey(0)
    input_size, output_size = 64, 256   # small I/O dims; hidden sizes fixed by module

    kp, kx1, kx2 = jax.random.split(key, 3)
    params = init_params(kp, input_size, output_size)
    prepared = prepare_params(params)   # one-time bf16 cast + w1 lane pad

    # Small batch -> single grid step, tile collapses to B (rounded to sublanes).
    batch_small = 16
    x_small = jax.random.normal(kx1, (batch_small, input_size), jnp.float32)
    out_small = jax.block_until_ready(generator_forward(x_small, prepared))
    ref_small = generator_ref(x_small, params)
    assert out_small.shape == (batch_small, output_size)
    # bf16 matmul operands (f32 accumulation) => relaxed tolerance vs f32 ref.
    assert jnp.allclose(out_small, ref_small, atol=5e-2, rtol=5e-2), \
        "mismatch vs reference (small batch)"

    # Larger batch, default tiling -> still a single grid step (520 <= 2048).
    batch_large = 520   # deliberately not sublane-aligned to exercise padding
    x_large = jax.random.normal(kx2, (batch_large, input_size), jnp.float32)
    out_large = jax.block_until_ready(generator_forward(x_large, prepared))
    ref_large = generator_ref(x_large, params)
    assert out_large.shape == (batch_large, output_size)
    assert jnp.allclose(out_large, ref_large, atol=5e-2, rtol=5e-2), \
        "mismatch vs reference (large batch, single step)"

    # Force the multi-step (even step count) path with a small tile cap.
    out_tiled = jax.block_until_ready(
        generator_forward(x_large, prepared, max_tile=256))
    assert out_tiled.shape == (batch_large, output_size)
    assert jnp.allclose(out_tiled, ref_large, atol=5e-2, rtol=5e-2), \
        "mismatch vs reference (multi-step tiling)"

    # bf16-output path (halves HBM writeback; useful on v6e).
    out_bf16 = jax.block_until_ready(
        generator_forward(x_large, prepared, out_dtype=jnp.bfloat16))
    assert out_bf16.dtype == jnp.bfloat16
    assert jnp.allclose(out_bf16.astype(jnp.float32), ref_large,
                        atol=8e-2, rtol=8e-2), \
        "mismatch vs reference (bf16 output)"

    print("KERNEL_OK")
</pallas_src>

<mosaic_0001>
module attributes {stable_mosaic.version = 11 : i64} {
  func.func @generator_kernel(%arg0: i32, %arg1: memref<16x128xbf16, #tpu.memory_space<vmem>>, %arg2: memref<128x128xbf16, #tpu.memory_space<vmem>>, %arg3: memref<1x128xf32, #tpu.memory_space<vmem>>, %arg4: memref<128x256xbf16, #tpu.memory_space<vmem>>, %arg5: memref<1x256xf32, #tpu.memory_space<vmem>>, %arg6: memref<256x512xbf16, #tpu.memory_space<vmem>>, %arg7: memref<1x512xf32, #tpu.memory_space<vmem>>, %arg8: memref<512x256xbf16, #tpu.memory_space<vmem>>, %arg9: memref<1x256xf32, #tpu.memory_space<vmem>>, %arg10: memref<16x256xf32, #tpu.memory_space<vmem>>) attributes {dimension_semantics = [#tpu.dimension_semantics<parallel>], iteration_bounds = array<i64: 1>, scalar_prefetch = 0 : i64, scratch_operands = 0 : i64, tpu.core_type = #tpu.core_type<tc>, window_params = [{transform_indices = @transform_0, window_bounds = array<i64: 16, 128>}, {pipeline_mode = #tpu.pipeline_mode<synchronous>, transform_indices = @transform_1, window_bounds = array<i64: 128, 128>}, {pipeline_mode = #tpu.pipeline_mode<synchronous>, transform_indices = @transform_2, window_bounds = array<i64: 1, 128>}, {pipeline_mode = #tpu.pipeline_mode<synchronous>, transform_indices = @transform_3, window_bounds = array<i64: 128, 256>}, {pipeline_mode = #tpu.pipeline_mode<synchronous>, transform_indices = @transform_4, window_bounds = array<i64: 1, 256>}, {pipeline_mode = #tpu.pipeline_mode<synchronous>, transform_indices = @transform_5, window_bounds = array<i64: 256, 512>}, {pipeline_mode = #tpu.pipeline_mode<synchronous>, transform_indices = @transform_6, window_bounds = array<i64: 1, 512>}, {pipeline_mode = #tpu.pipeline_mode<synchronous>, transform_indices = @transform_7, window_bounds = array<i64: 512, 256>}, {pipeline_mode = #tpu.pipeline_mode<synchronous>, transform_indices = @transform_8, window_bounds = array<i64: 1, 256>}, {transform_indices = @transform_9, window_bounds = array<i64: 16, 256>}]} {
    %c0 = arith.constant 0 : index
    %c0_0 = arith.constant 0 : index
    %0 = vector.load %arg1[%c0, %c0_0] : memref<16x128xbf16, #tpu.memory_space<vmem>>, vector<16x128xbf16>
    %c0_1 = arith.constant 0 : index
    %c0_2 = arith.constant 0 : index
    %1 = vector.load %arg2[%c0_1, %c0_2] : memref<128x128xbf16, #tpu.memory_space<vmem>>, vector<128x128xbf16>
    %cst = arith.constant dense<0.000000e+00> : vector<16x128xf32>
    %2 = tpu.matmul %0, %1, %cst {dimension_numbers = #tpu.dot_dimension_numbers<[1], [0], [0], [1], [0, 0, 1, 1], [], []>} : vector<16x128xbf16>, vector<128x128xbf16>, vector<16x128xf32> -> vector<16x128xf32>
    %c0_3 = arith.constant 0 : index
    %c0_4 = arith.constant 0 : index
    %3 = vector.load %arg3[%c0_3, %c0_4] : memref<1x128xf32, #tpu.memory_space<vmem>>, vector<1x128xf32>
    %4 = vector.broadcast %3 : vector<1x128xf32> to vector<16x128xf32>
    %5 = arith.addf %2, %4 : vector<16x128xf32>
    %cst_5 = arith.constant 0.000000e+00 : f32
    %6 = vector.broadcast %cst_5 : f32 to vector<16x128xf32>
    %7 = arith.cmpf ogt, %5, %6 : vector<16x128xf32>
    %cst_6 = arith.constant 2.000000e-01 : f32
    %8 = vector.broadcast %cst_6 : f32 to vector<16x128xf32>
    %9 = arith.mulf %8, %5 : vector<16x128xf32>
    %10 = arith.select %7, %5, %9 : vector<16x128xi1>, vector<16x128xf32>
    %11 = arith.truncf %10 : vector<16x128xf32> to vector<16x128xbf16>
    %c0_7 = arith.constant 0 : index
    %c0_8 = arith.constant 0 : index
    %12 = vector.load %arg4[%c0_7, %c0_8] : memref<128x256xbf16, #tpu.memory_space<vmem>>, vector<128x256xbf16>
    %cst_9 = arith.constant dense<0.000000e+00> : vector<16x256xf32>
    %13 = tpu.matmul %11, %12, %cst_9 {dimension_numbers = #tpu.dot_dimension_numbers<[1], [0], [0], [1], [0, 0, 1, 1], [], []>} : vector<16x128xbf16>, vector<128x256xbf16>, vector<16x256xf32> -> vector<16x256xf32>
    %c0_10 = arith.constant 0 : index
    %c0_11 = arith.constant 0 : index
    %14 = vector.load %arg5[%c0_10, %c0_11] : memref<1x256xf32, #tpu.memory_space<vmem>>, vector<1x256xf32>
    %15 = vector.broadcast %14 : vector<1x256xf32> to vector<16x256xf32>
    %16 = arith.addf %13, %15 : vector<16x256xf32>
    %cst_12 = arith.constant 0.000000e+00 : f32
    %17 = vector.broadcast %cst_12 : f32 to vector<16x256xf32>
    %18 = arith.cmpf ogt, %16, %17 : vector<16x256xf32>
    %cst_13 = arith.constant 2.000000e-01 : f32
    %19 = vector.broadcast %cst_13 : f32 to vector<16x256xf32>
    %20 = arith.mulf %19, %16 : vector<16x256xf32>
    %21 = arith.select %18, %16, %20 : vector<16x256xi1>, vector<16x256xf32>
    %22 = arith.truncf %21 : vector<16x256xf32> to vector<16x256xbf16>
    %c0_14 = arith.constant 0 : index
    %c0_15 = arith.constant 0 : index
    %23 = vector.load %arg6[%c0_14, %c0_15] : memref<256x512xbf16, #tpu.memory_space<vmem>>, vector<256x512xbf16>
    %cst_16 = arith.constant dense<0.000000e+00> : vector<16x512xf32>
    %24 = tpu.matmul %22, %23, %cst_16 {dimension_numbers = #tpu.dot_dimension_numbers<[1], [0], [0], [1], [0, 0, 1, 1], [], []>} : vector<16x256xbf16>, vector<256x512xbf16>, vector<16x512xf32> -> vector<16x512xf32>
    %c0_17 = arith.constant 0 : index
    %c0_18 = arith.constant 0 : index
    %25 = vector.load %arg7[%c0_17, %c0_18] : memref<1x512xf32, #tpu.memory_space<vmem>>, vector<1x512xf32>
    %26 = vector.broadcast %25 : vector<1x512xf32> to vector<16x512xf32>
    %27 = arith.addf %24, %26 : vector<16x512xf32>
    %cst_19 = arith.constant 0.000000e+00 : f32
    %28 = vector.broadcast %cst_19 : f32 to vector<16x512xf32>
    %29 = arith.cmpf ogt, %27, %28 : vector<16x512xf32>
    %cst_20 = arith.constant 2.000000e-01 : f32
    %30 = vector.broadcast %cst_20 : f32 to vector<16x512xf32>
    %31 = arith.mulf %30, %27 : vector<16x512xf32>
    %32 = arith.select %29, %27, %31 : vector<16x512xi1>, vector<16x512xf32>
    %33 = arith.truncf %32 : vector<16x512xf32> to vector<16x512xbf16>
    %c0_21 = arith.constant 0 : index
    %c0_22 = arith.constant 0 : index
    %34 = vector.load %arg8[%c0_21, %c0_22] : memref<512x256xbf16, #tpu.memory_space<vmem>>, vector<512x256xbf16>
    %cst_23 = arith.constant dense<0.000000e+00> : vector<16x256xf32>
    %35 = tpu.matmul %33, %34, %cst_23 {dimension_numbers = #tpu.dot_dimension_numbers<[1], [0], [0], [1], [0, 0, 1, 1], [], []>} : vector<16x512xbf16>, vector<512x256xbf16>, vector<16x256xf32> -> vector<16x256xf32>
    %c0_24 = arith.constant 0 : index
    %c0_25 = arith.constant 0 : index
    %36 = vector.load %arg9[%c0_24, %c0_25] : memref<1x256xf32, #tpu.memory_space<vmem>>, vector<1x256xf32>
    %37 = vector.broadcast %36 : vector<1x256xf32> to vector<16x256xf32>
    %38 = arith.addf %35, %37 : vector<16x256xf32>
    %39 = math.tanh %38 : vector<16x256xf32>
    %c0_26 = arith.constant 0 : index
    %c0_27 = arith.constant 0 : index
    %40 = vector.load %arg10[%c0_26, %c0_27] : memref<16x256xf32, #tpu.memory_space<vmem>>, vector<16x256xf32>
    tpu.vector_store %arg10[%c0_26, %c0_27], %39 {strides = array<i32>} : memref<16x256xf32, #tpu.memory_space<vmem>>, vector<16x256xf32>,
    return
  }
  func.func @transform_0(%arg0: i32) -> (i32, i32) {
    %c0_i32 = arith.constant 0 : i32
    %c0_i32_0 = arith.constant 0 : i32
    return %arg0, %c0_i32 : i32, i32
  }
  func.func @transform_1(%arg0: i32) -> (i32, i32) {
    %c0_i32 = arith.constant 0 : i32
    %c0_i32_0 = arith.constant 0 : i32
    %c0_i32_1 = arith.constant 0 : i32
    return %c0_i32, %c0_i32_0 : i32, i32
  }
  func.func @transform_2(%arg0: i32) -> (i32, i32) {
    %c0_i32 = arith.constant 0 : i32
    %c0_i32_0 = arith.constant 0 : i32
    %c0_i32_1 = arith.constant 0 : i32
    return %c0_i32, %c0_i32_0 : i32, i32
  }
  func.func @transform_3(%arg0: i32) -> (i32, i32) {
    %c0_i32 = arith.constant 0 : i32
    %c0_i32_0 = arith.constant 0 : i32
    %c0_i32_1 = arith.constant 0 : i32
    return %c0_i32, %c0_i32_0 : i32, i32
  }
  func.func @transform_4(%arg0: i32) -> (i32, i32) {
    %c0_i32 = arith.constant 0 : i32
    %c0_i32_0 = arith.constant 0 : i32
    %c0_i32_1 = arith.constant 0 : i32
    return %c0_i32, %c0_i32_0 : i32, i32
  }
  func.func @transform_5(%arg0: i32) -> (i32, i32) {
    %c0_i32 = arith.constant 0 : i32
    %c0_i32_0 = arith.constant 0 : i32
    %c0_i32_1 = arith.constant 0 : i32
    return %c0_i32, %c0_i32_0 : i32, i32
  }
  func.func @transform_6(%arg0: i32) -> (i32, i32) {
    %c0_i32 = arith.constant 0 : i32
    %c0_i32_0 = arith.constant 0 : i32
    %c0_i32_1 = arith.constant 0 : i32
    return %c0_i32, %c0_i32_0 : i32, i32
  }
  func.func @transform_7(%arg0: i32) -> (i32, i32) {
    %c0_i32 = arith.constant 0 : i32
    %c0_i32_0 = arith.constant 0 : i32
    %c0_i32_1 = arith.constant 0 : i32
    return %c0_i32, %c0_i32_0 : i32, i32
  }
  func.func @transform_8(%arg0: i32) -> (i32, i32) {
    %c0_i32 = arith.constant 0 : i32
    %c0_i32_0 = arith.constant 0 : i32
    %c0_i32_1 = arith.constant 0 : i32
    return %c0_i32, %c0_i32_0 : i32, i32
  }
  func.func @transform_9(%arg0: i32) -> (i32, i32) {
    %c0_i32 = arith.constant 0 : i32
    %c0_i32_0 = arith.constant 0 : i32
    return %arg0, %c0_i32 : i32, i32
  }
}

</mosaic_0001>

<llo_original>
// kernel: generator_forward.1
$region0: #{generator_forward.1}
  #allocation0 [shape = 'u32[]', space=smem, size = 0x4, offset = 0x4, fixed_abs, tag = 'smem constant byte address 0x4 - core index']
  #allocation1 [shape = 'u32[144,128]{1,0:T(1,128)}', space=vmem, size = 0x12000, scoped, tag = 'internal scratch']
  %s0 = inlined_call_operand.vmem [shape: bf16[16,128], index: 0, kind: input, shape index: {}]
  %s1 = inlined_call_operand.hbm [shape: bf16[128,128], index: 1, kind: input, shape index: {}]
  %s2 = inlined_call_operand.vmem [shape: f32[1,128], index: 2, kind: input, shape index: {}]
  %s3 = inlined_call_operand.hbm [shape: bf16[128,256], index: 3, kind: input, shape index: {}]
  %s4 = inlined_call_operand.vmem [shape: f32[1,256], index: 4, kind: input, shape index: {}]
  %s5 = inlined_call_operand.hbm [shape: bf16[256,512], index: 5, kind: input, shape index: {}]
  %s6 = inlined_call_operand.vmem [shape: f32[1,512], index: 6, kind: input, shape index: {}]
  %s7 = inlined_call_operand.hbm [shape: bf16[512,256], index: 7, kind: input, shape index: {}]
  %s8 = inlined_call_operand.vmem [shape: f32[1,256], index: 8, kind: input, shape index: {}]
  %s9 = inlined_call_operand.hbm [shape: f32[16,256], index: 9, kind: output, shape index: {}]
  %s10 = sld [smem:[#allocation0]]
  $region62: #{generator_forward.1} parent=0
    _
  %s12 = ssub.s32 1, %s10
  %s13 = scalar_select 0, %s12, %s10
  $region1: #{generator_forward.1} parent=0
    #allocation2 [shape = 'u8[32768]{0}', space=vmem, size = 0x8000, scoped, tag = 'input window, operand 1, single buffered']
    #allocation3 [shape = 's32[1]{0}', space=sflag, size = 0x4, scoped, tag = 'scoped memory for generator_forward.1']
    #allocation4 [shape = 's32[1]{0}', space=sflag, size = 0x4, scoped, tag = 'scoped memory for generator_forward.1']
    #allocation5 [shape = 'u8[65536]{0}', space=vmem, size = 0x10000, scoped, tag = 'input window, operand 3, single buffered']
    #allocation6 [shape = 's32[1]{0}', space=sflag, size = 0x4, scoped, tag = 'scoped memory for generator_forward.1']
    #allocation7 [shape = 'u8[262144]{0}', space=vmem, size = 0x40000, scoped, tag = 'input window, operand 5, single buffered']
    #allocation8 [shape = 'u8[262144]{0}', space=vmem, size = 0x40000, scoped, tag = 'input window, operand 7, single buffered']
    #allocation9 [shape = 's32[1]{0}', space=sflag, size = 0x4, scoped, tag = 'scoped memory for generator_forward.1']
    #allocation10 [shape = 'u8[16384]{0}', space=vmem, size = 0x4000, scoped, tag = 'output window, operand 0, single buffered']
    %14 = vsyncpa [#allocation3], 0
    %15 = vsyncpa [#allocation6], 0
    %16 = vsyncpa [#allocation9], 0
    %17 = vsyncpa [#allocation4], 0
    // Predicated region
    $region2: #{generator_forward.1} parent=1 // pred_check
      _
    $region3: #{generator_forward.1} parent=1 // pred_check_branch
      %19 = sbr.rel (0) target = $region5
    $region4: #{generator_forward.1} parent=1 // pred_region
      _
    $region5: #{generator_forward.1} parent=1 // pred_fallthru
      _
    // Predicated region
    $region6: #{generator_forward.1} parent=1 // pred_check
      _
    $region7: #{generator_forward.1} parent=1 // pred_check_branch
      %21 = sbr.rel (0) target = $region9
    $region8: #{generator_forward.1} parent=1 // pred_region
      %s23 = ssub.s32 1024, 1024
      %24 = vsyncadd [#allocation3], %s23
      %s25 = sshll.u32 [#allocation2], 4
      %s26 = int_to_ptr.vmem [resolvable:$true] %s25
      %31 = dma.hbm_to_vmem [thread:$0]  %s1, 1024, %s26, [#allocation3], 64, 64, 4
    $region9: #{generator_forward.1} parent=1 // pred_fallthru
      _
    // Predicated region
    $region10: #{generator_forward.1} parent=1 // pred_check
      _
    $region11: #{generator_forward.1} parent=1 // pred_check_branch
      %33 = sbr.rel (0) target = $region13
    $region12: #{generator_forward.1} parent=1 // pred_region
      _
    $region13: #{generator_forward.1} parent=1 // pred_fallthru
      _
    // Predicated region
    $region14: #{generator_forward.1} parent=1 // pred_check
      _
    $region15: #{generator_forward.1} parent=1 // pred_check_branch
      %35 = sbr.rel (0) target = $region17
    $region16: #{generator_forward.1} parent=1 // pred_region
      %s37 = ssub.s32 2048, 2048
      %38 = vsyncadd [#allocation6], %s37
      %s39 = sshll.u32 [#allocation5], 4
      %s40 = int_to_ptr.vmem [resolvable:$true] %s39
      %45 = dma.hbm_to_vmem [thread:$0]  %s3, 2048, %s40, [#allocation6], 128, 128, 8
    $region17: #{generator_forward.1} parent=1 // pred_fallthru
      _
    // Predicated region
    $region18: #{generator_forward.1} parent=1 // pred_check
      _
    $region19: #{generator_forward.1} parent=1 // pred_check_branch
      %47 = sbr.rel (0) target = $region21
    $region20: #{generator_forward.1} parent=1 // pred_region
      _
    $region21: #{generator_forward.1} parent=1 // pred_fallthru
      _
    // Predicated region
    $region22: #{generator_forward.1} parent=1 // pred_check
      _
    $region23: #{generator_forward.1} parent=1 // pred_check_branch
      %49 = sbr.rel (0) target = $region25
    $region24: #{generator_forward.1} parent=1 // pred_region
      %s51 = ssub.s32 8192, 8192
      %52 = vsyncadd [#allocation6], %s51
      %s53 = sshll.u32 [#allocation7], 4
      %s54 = int_to_ptr.vmem [resolvable:$true] %s53
      %59 = dma.hbm_to_vmem [thread:$0]  %s5, 8192, %s54, [#allocation6], 256, 256, 16
    $region25: #{generator_forward.1} parent=1 // pred_fallthru
      _
    // Predicated region
    $region26: #{generator_forward.1} parent=1 // pred_check
      _
    $region27: #{generator_forward.1} parent=1 // pred_check_branch
      %61 = sbr.rel (0) target = $region29
    $region28: #{generator_forward.1} parent=1 // pred_region
      _
    $region29: #{generator_forward.1} parent=1 // pred_fallthru
      _
    // Predicated region
    $region30: #{generator_forward.1} parent=1 // pred_check
      _
    $region31: #{generator_forward.1} parent=1 // pred_check_branch
      %63 = sbr.rel (0) target = $region33
    $region32: #{generator_forward.1} parent=1 // pred_region
      %s65 = ssub.s32 8192, 8192
      %66 = vsyncadd [#allocation9], %s65
      %s67 = sshll.u32 [#allocation8], 4
      %s68 = int_to_ptr.vmem [resolvable:$true] %s67
      %73 = dma.hbm_to_vmem [thread:$0]  %s7, 8192, %s68, [#allocation9], 128, 128, 8
    $region33: #{generator_forward.1} parent=1 // pred_fallthru
      _
    // Predicated region
    $region34: #{generator_forward.1} parent=1 // pred_check
      _
    $region35: #{generator_forward.1} parent=1 // pred_check_branch
      %75 = sbr.rel (0) target = $region37
    $region36: #{generator_forward.1} parent=1 // pred_region
      _
    $region37: #{generator_forward.1} parent=1 // pred_fallthru
      _
    // Predicated region
    $region38: #{generator_forward.1} parent=1 // pred_check
      _
    $region39: #{generator_forward.1} parent=1 // pred_check_branch
      %77 = sbr.rel (0) target = $region41
    $region40: #{generator_forward.1} parent=1 // pred_region
      %78 = dma.done [#allocation3], 1024
    $region41: #{generator_forward.1} parent=1 // pred_fallthru
      _
    // Predicated region
    $region42: #{generator_forward.1} parent=1 // pred_check
      _
    $region43: #{generator_forward.1} parent=1 // pred_check_branch
      %80 = sbr.rel (0) target = $region45
    $region44: #{generator_forward.1} parent=1 // pred_region
      %81 = dma.done [#allocation6], 2048
    $region45: #{generator_forward.1} parent=1 // pred_fallthru
      _
    // Predicated region
    $region46: #{generator_forward.1} parent=1 // pred_check
      _
    $region47: #{generator_forward.1} parent=1 // pred_check_branch
      %83 = sbr.rel (0) target = $region49
    $region48: #{generator_forward.1} parent=1 // pred_region
      %84 = dma.done [#allocation6], 8192
    $region49: #{generator_forward.1} parent=1 // pred_fallthru
      _
    // Predicated region
    $region50: #{generator_forward.1} parent=1 // pred_check
      _
    $region51: #{generator_forward.1} parent=1 // pred_check_branch
      %86 = sbr.rel (0) target = $region53
    $region52: #{generator_forward.1} parent=1 // pred_region
      %87 = dma.done [#allocation9], 8192
    $region53: #{generator_forward.1} parent=1 // pred_fallthru
      _
    %v89 = vld [vmem:[%s0] sm:$0xf]
    %v90 = vld [vmem:[%s0 + $0x4] sm:$0xf]
    %v91 = vld [vmem:[#allocation2] sm:$0xf]
    %v92 = vld [vmem:[#allocation2 + $0x4] sm:$0xf]
    %v93 = vld [vmem:[#allocation2 + $0x8] sm:$0xf]
    %v94 = vld [vmem:[#allocation2 + $0xc] sm:$0xf]
    %v95 = vld [vmem:[#allocation2 + $0x10] sm:$0xf]
    %v96 = vld [vmem:[#allocation2 + $0x14] sm:$0xf]
    %v97 = vld [vmem:[#allocation2 + $0x18] sm:$0xf]
    %v98 = vld [vmem:[#allocation2 + $0x1c] sm:$0xf]
    %v99 = vld [vmem:[#allocation2 + $0x20] sm:$0xf]
    %v100 = vld [vmem:[#allocation2 + $0x24] sm:$0xf]
    %v101 = vld [vmem:[#allocation2 + $0x28] sm:$0xf]
    %v102 = vld [vmem:[#allocation2 + $0x2c] sm:$0xf]
    %v103 = vld [vmem:[#allocation2 + $0x30] sm:$0xf]
    %v104 = vld [vmem:[#allocation2 + $0x34] sm:$0xf]
    %v105 = vld [vmem:[#allocation2 + $0x38] sm:$0xf]
    %v106 = vld [vmem:[#allocation2 + $0x3c] sm:$0xf]
    %v107 = vld [vmem:[%s2] sm:$0x1]
    %v109 = vlaneseq
    %v110 = vshrl.u32 %v109, 7
    %v111 = vsub.s32 0, %v110
    %v112 = vrot.slane %v107, %v111
    %v116 = vunpack.c.l.b16 %v89
    %v117 = vunpack.c.l.b16 %v90
    %v118 = vpack.c.b16 %v117, %v116
    %v136 = vunpack.c.l.b16 %v91
    %v137 = vunpack.c.l.b16 %v92
    %v138 = vunpack.c.l.b16 %v93
    %v139 = vunpack.c.l.b16 %v94
    %v140 = vunpack.c.l.b16 %v95
    %v141 = vunpack.c.l.b16 %v96
    %v142 = vunpack.c.l.b16 %v97
    %v143 = vunpack.c.l.b16 %v98
    %v144 = vunpack.c.l.b16 %v99
    %v145 = vunpack.c.l.b16 %v100
    %v146 = vunpack.c.l.b16 %v101
    %v147 = vunpack.c.l.b16 %v102
    %v148 = vunpack.c.l.b16 %v103
    %v149 = vunpack.c.l.b16 %v104
    %v150 = vunpack.c.l.b16 %v105
    %v151 = vunpack.c.l.b16 %v106
    %v152 = vpack.c.b16 %v137, %v136
    %v153 = vpack.c.b16 %v139, %v138
    %v154 = vpack.c.b16 %v141, %v140
    %v155 = vpack.c.b16 %v143, %v142
    %v156 = vpack.c.b16 %v145, %v144
    %v157 = vpack.c.b16 %v147, %v146
    %v158 = vpack.c.b16 %v149, %v148
    %v159 = vpack.c.b16 %v151, %v150
    %168 = vmatprep.subr.bf16.mxu0 0
    %169 = vmatpush1.bf16.msra.mxu0 %v152
    %170 = vmatprep.subr.bf16.mxu0 0
    %171 = vmatpush1.bf16.msra.mxu0 %v153
    %172 = vmatprep.subr.bf16.mxu0 0
    %173 = vmatpush1.bf16.msra.mxu0 %v154
    %174 = vmatprep.subr.bf16.mxu0 0
    %175 = vmatpush1.bf16.msra.mxu0 %v155
    %176 = vmatprep.subr.bf16.mxu0 0
    %177 = vmatpush1.bf16.msra.mxu0 %v156
    %178 = vmatprep.subr.bf16.mxu0 0
    %179 = vmatpush1.bf16.msra.mxu0 %v157
    %180 = vmatprep.subr.bf16.mxu0 0
    %181 = vmatpush1.bf16.msra.mxu0 %v158
    %182 = vmatprep.subr.bf16.mxu0 0
    %183 = vmatpush1.bf16.msra.mxu0 %v159
    %184 = vmatprep.subr.bf16.mxu0 0
    %185 = vmatpush1.bf16.msra.mxu0 0
    %186 = vmatprep.subr.bf16.mxu0 0
    %187 = vmatpush1.bf16.msra.mxu0 0
    %188 = vmatprep.subr.bf16.mxu0 0
    %189 = vmatpush1.bf16.msra.mxu0 0
    %190 = vmatprep.subr.bf16.mxu0 0
    %191 = vmatpush1.bf16.msra.mxu0 0
    %192 = vmatprep.subr.bf16.mxu0 0
    %193 = vmatpush1.bf16.msra.mxu0 0
    %194 = vmatprep.subr.bf16.mxu0 0
    %195 = vmatpush1.bf16.msra.mxu0 0
    %196 = vmatprep.subr.bf16.mxu0 0
    %197 = vmatpush1.bf16.msra.mxu0 0
    %198 = vmatprep.subr.bf16.mxu0 0
    %199 = vmatpush1.bf16.msra.mxu0 0
    %200 = vmatprep.mubr.bf16.mxu0 0
    %201 = vmatmul.mubr.bf16.gmra.mrb[0].mxu0 %v118
    %v202 = vpop.f32.mrb[0].mxu0
    %v203 = vadd.f32 %v112, %v202
    %v204 = vpop.f32.mrb[0].mxu0
    %v205 = vpop.f32.mrb[0].mxu0
    %v206 = vadd.f32 %v112, %v205
    %v207 = vpop.f32.mrb[0].mxu0
    %208 = vdwg.mxu0
    %vm209 = vcmp.gt.f32.partialorder %v203, 0.0
    %vm210 = vcmp.gt.f32.partialorder %v206, 0.0
    %v211 = vmul.f32 %v203, 0.2
    %v212 = vmul.f32 %v206, 0.2
    %v213 = vsel %vm209, %v203, %v211
    %v214 = vsel %vm210, %v206, %v212
    %v215 = vpack.c.bf16 %v214, %v213
    %v216 = vld [vmem:[#allocation5] sm:$0xff]
    %v217 = vld [vmem:[#allocation5 + $0x8] sm:$0xff]
    %v218 = vld [vmem:[#allocation5 + $0x10] sm:$0xff]
    %v219 = vld [vmem:[#allocation5 + $0x18] sm:$0xff]
    %v220 = vld [vmem:[#allocation5 + $0x20] sm:$0xff]
    %v221 = vld [vmem:[#allocation5 + $0x28] sm:$0xff]
    %v222 = vld [vmem:[#allocation5 + $0x30] sm:$0xff]
    %v223 = vld [vmem:[#allocation5 + $0x38] sm:$0xff]
    %v224 = vld [vmem:[#allocation5 + $0x40] sm:$0xff]
    %v225 = vld [vmem:[#allocation5 + $0x48] sm:$0xff]
    %v226 = vld [vmem:[#allocation5 + $0x50] sm:$0xff]
    %v227 = vld [vmem:[#allocation5 + $0x58] sm:$0xff]
    %v228 = vld [vmem:[#allocation5 + $0x60] sm:$0xff]
    %v229 = vld [vmem:[#allocation5 + $0x68] sm:$0xff]
    %v230 = vld [vmem:[#allocation5 + $0x70] sm:$0xff]
    %v231 = vld [vmem:[#allocation5 + $0x78] sm:$0xff]
    %v232 = vld [vmem:[%s4] sm:$0x3]
    %v234 = vlaneseq
    %v235 = vshrl.u32 %v234, 7
    %v236 = vsub.s32 0, %v235
    %v237 = vrot.slane %v232, %v236
    %v238 = vlaneseq
    %v239 = vshrl.u32 %v238, 7
    %v240 = vsub.s32 1, %v239
    %v241 = vrot.slane %v232, %v240
    %v260 = vunpack.c.l.b16 %v216
    %v261 = vunpack.c.h.b16 %v216
    %v262 = vunpack.c.l.b16 %v217
    %v263 = vunpack.c.h.b16 %v217
    %v264 = vunpack.c.l.b16 %v218
    %v265 = vunpack.c.h.b16 %v218
    %v266 = vunpack.c.l.b16 %v219
    %v267 = vunpack.c.h.b16 %v219
    %v268 = vunpack.c.l.b16 %v220
    %v269 = vunpack.c.h.b16 %v220
    %v270 = vunpack.c.l.b16 %v221
    %v271 = vunpack.c.h.b16 %v221
    %v272 = vunpack.c.l.b16 %v222
    %v273 = vunpack.c.h.b16 %v222
    %v274 = vunpack.c.l.b16 %v223
    %v275 = vunpack.c.h.b16 %v223
    %v276 = vunpack.c.l.b16 %v224
    %v277 = vunpack.c.h.b16 %v224
    %v278 = vunpack.c.l.b16 %v225
    %v279 = vunpack.c.h.b16 %v225
    %v280 = vunpack.c.l.b16 %v226
    %v281 = vunpack.c.h.b16 %v226
    %v282 = vunpack.c.l.b16 %v227
    %v283 = vunpack.c.h.b16 %v227
    %v284 = vunpack.c.l.b16 %v228
    %v285 = vunpack.c.h.b16 %v228
    %v286 = vunpack.c.l.b16 %v229
    %v287 = vunpack.c.h.b16 %v229
    %v288 = vunpack.c.l.b16 %v230
    %v289 = vunpack.c.h.b16 %v230
    %v290 = vunpack.c.l.b16 %v231
    %v291 = vunpack.c.h.b16 %v231
    %v292 = vpack.c.b16 %v262, %v260
    %v293 = vpack.c.b16 %v263, %v261
    %v294 = vpack.c.b16 %v266, %v264
    %v295 = vpack.c.b16 %v267, %v265
    %v296 = vpack.c.b16 %v270, %v268
    %v297 = vpack.c.b16 %v271, %v269
    %v298 = vpack.c.b16 %v274, %v272
    %v299 = vpack.c.b16 %v275, %v273
    %v300 = vpack.c.b16 %v278, %v276
    %v301 = vpack.c.b16 %v279, %v277
    %v302 = vpack.c.b16 %v282, %v280
    %v303 = vpack.c.b16 %v283, %v281
    %v304 = vpack.c.b16 %v286, %v284
    %v305 = vpack.c.b16 %v287, %v285
    %v306 = vpack.c.b16 %v290, %v288
    %v307 = vpack.c.b16 %v291, %v289
    %324 = vmatprep.subr.bf16.mxu0 %v293
    %325 = vmatpush1.bf16.msra.mxu0 %v292
    %326 = vmatprep.subr.bf16.mxu0 %v295
    %327 = vmatpush1.bf16.msra.mxu0 %v294
    %328 = vmatprep.subr.bf16.mxu0 %v297
    %329 = vmatpush1.bf16.msra.mxu0 %v296
    %330 = vmatprep.subr.bf16.mxu0 %v299
    %331 = vmatpush1.bf16.msra.mxu0 %v298
    %332 = vmatprep.subr.bf16.mxu0 %v301
    %333 = vmatpush1.bf16.msra.mxu0 %v300
    %334 = vmatprep.subr.bf16.mxu0 %v303
    %335 = vmatpush1.bf16.msra.mxu0 %v302
    %336 = vmatprep.subr.bf16.mxu0 %v305
    %337 = vmatpush1.bf16.msra.mxu0 %v304
    %338 = vmatprep.subr.bf16.mxu0 %v307
    %339 = vmatpush1.bf16.msra.mxu0 %v306
    %340 = vmatprep.subr.bf16.mxu0 0
    %341 = vmatpush1.bf16.msra.mxu0 0
    %342 = vmatprep.subr.bf16.mxu0 0
    %343 = vmatpush1.bf16.msra.mxu0 0
    %344 = vmatprep.subr.bf16.mxu0 0
    %345 = vmatpush1.bf16.msra.mxu0 0
    %346 = vmatprep.subr.bf16.mxu0 0
    %347 = vmatpush1.bf16.msra.mxu0 0
    %348 = vmatprep.subr.bf16.mxu0 0
    %349 = vmatpush1.bf16.msra.mxu0 0
    %350 = vmatprep.subr.bf16.mxu0 0
    %351 = vmatpush1.bf16.msra.mxu0 0
    %352 = vmatprep.subr.bf16.mxu0 0
    %353 = vmatpush1.bf16.msra.mxu0 0
    %354 = vmatprep.subr.bf16.mxu0 0
    %355 = vmatpush1.bf16.msra.mxu0 0
    %356 = vmatprep.mubr.bf16.mxu0 0
    %357 = vmatmul.mubr.bf16.gmra.mrb[0].mxu0 %v215
    %v358 = vpop.f32.mrb[0].mxu0
    %v359 = vadd.f32 %v237, %v358
    %v360 = vpop.f32.mrb[0].mxu0
    %v361 = vadd.f32 %v241, %v360
    %v362 = vpop.f32.mrb[0].mxu0
    %v363 = vadd.f32 %v237, %v362
    %v364 = vpop.f32.mrb[0].mxu0
    %v365 = vadd.f32 %v241, %v364
    %366 = vdwg.mxu0
    %vm367 = vcmp.gt.f32.partialorder %v359, 0.0
    %vm368 = vcmp.gt.f32.partialorder %v361, 0.0
    %vm369 = vcmp.gt.f32.partialorder %v363, 0.0
    %vm370 = vcmp.gt.f32.partialorder %v365, 0.0
    %v371 = vmul.f32 %v359, 0.2
    %v372 = vmul.f32 %v361, 0.2
    %v373 = vmul.f32 %v363, 0.2
    %v374 = vmul.f32 %v365, 0.2
    %v375 = vsel %vm367, %v359, %v371
    %v376 = vsel %vm368, %v361, %v372
    %v377 = vsel %vm369, %v363, %v373
    %v378 = vsel %vm370, %v365, %v374
    %v379 = vpack.c.bf16 %v377, %v375
    %v380 = vpack.c.bf16 %v378, %v376
    %v381 = vld [vmem:[#allocation7] sm:$0xff]
    %v382 = vld [vmem:[#allocation7 + $0x8] sm:$0xff]
    %v383 = vld [vmem:[#allocation7 + $0x10] sm:$0xff]
    %v384 = vld [vmem:[#allocation7 + $0x18] sm:$0xff]
    %v385 = vld [vmem:[#allocation7 + $0x20] sm:$0xff]
    %v386 = vld [vmem:[#allocation7 + $0x28] sm:$0xff]
    %v387 = vld [vmem:[#allocation7 + $0x30] sm:$0xff]
    %v388 = vld [vmem:[#allocation7 + $0x38] sm:$0xff]
    %v389 = vld [vmem:[#allocation7 + $0x40] sm:$0xff]
    %v390 = vld [vmem:[#allocation7 + $0x48] sm:$0xff]
    %v391 = vld [vmem:[#allocation7 + $0x50] sm:$0xff]
    %v392 = vld [vmem:[#allocation7 + $0x58] sm:$0xff]
    %v393 = vld [vmem:[#allocation7 + $0x60] sm:$0xff]
    %v394 = vld [vmem:[#allocation7 + $0x68] sm:$0xff]
    %v395 = vld [vmem:[#allocation7 + $0x70] sm:$0xff]
    %v396 = vld [vmem:[#allocation7 + $0x78] sm:$0xff]
    %v397 = vld [vmem:[#allocation7 + $0x80] sm:$0xff]
    %v398 = vld [vmem:[#allocation7 + $0x88] sm:$0xff]
    %v399 = vld [vmem:[#allocation7 + $0x90] sm:$0xff]
    %v400 = vld [vmem:[#allocation7 + $0x98] sm:$0xff]
    %v401 = vld [vmem:[#allocation7 + $0xa0] sm:$0xff]
    %v402 = vld [vmem:[#allocation7 + $0xa8] sm:$0xff]
    %v403 = vld [vmem:[#allocation7 + $0xb0] sm:$0xff]
    %v404 = vld [vmem:[#allocation7 + $0xb8] sm:$0xff]
    %v405 = vld [vmem:[#allocation7 + $0xc0] sm:$0xff]
    %v406 = vld [vmem:[#allocation7 + $0xc8] sm:$0xff]
    %v407 = vld [vmem:[#allocation7 + $0xd0] sm:$0xff]
    %v408 = vld [vmem:[#allocation7 + $0xd8] sm:$0xff]
    %v409 = vld [vmem:[#allocation7 + $0xe0] sm:$0xff]
    %v410 = vld [vmem:[#allocation7 + $0xe8] sm:$0xff]
    %v411 = vld [vmem:[#allocation7 + $0xf0] sm:$0xff]
    %v412 = vld [vmem:[#allocation7 + $0xf8] sm:$0xff]
    %v413 = vld [vmem:[#allocation7 + $0x100] sm:$0xff]
    %v414 = vld [vmem:[#allocation7 + $0x108] sm:$0xff]
    %v415 = vld [vmem:[#allocation7 + $0x110] sm:$0xff]
    %v416 = vld [vmem:[#allocation7 + $0x118] sm:$0xff]
    %v417 = vld [vmem:[#allocation7 + $0x120] sm:$0xff]
    %v418 = vld [vmem:[#allocation7 + $0x128] sm:$0xff]
    %v419 = vld [vmem:[#allocation7 + $0x130] sm:$0xff]
    %v420 = vld [vmem:[#allocation7 + $0x138] sm:$0xff]
    %v421 = vld [vmem:[#allocation7 + $0x140] sm:$0xff]
    %v422 = vld [vmem:[#allocation7 + $0x148] sm:$0xff]
    %v423 = vld [vmem:[#allocation7 + $0x150] sm:$0xff]
    %v424 = vld [vmem:[#allocation7 + $0x158] sm:$0xff]
    %v425 = vld [vmem:[#allocation7 + $0x160] sm:$0xff]
    %v426 = vld [vmem:[#allocation7 + $0x168] sm:$0xff]
    %v427 = vld [vmem:[#allocation7 + $0x170] sm:$0xff]
    %v428 = vld [vmem:[#allocation7 + $0x178] sm:$0xff]
    %v429 = vld [vmem:[#allocation7 + $0x180] sm:$0xff]
    %v430 = vld [vmem:[#allocation7 + $0x188] sm:$0xff]
    %v431 = vld [vmem:[#allocation7 + $0x190] sm:$0xff]
    %v432 = vld [vmem:[#allocation7 + $0x198] sm:$0xff]
    %v433 = vld [vmem:[#allocation7 + $0x1a0] sm:$0xff]
    %v434 = vld [vmem:[#allocation7 + $0x1a8] sm:$0xff]
    %v435 = vld [vmem:[#allocation7 + $0x1b0] sm:$0xff]
    %v436 = vld [vmem:[#allocation7 + $0x1b8] sm:$0xff]
    %v437 = vld [vmem:[#allocation7 + $0x1c0] sm:$0xff]
    %v438 = vld [vmem:[#allocation7 + $0x1c8] sm:$0xff]
    %v439 = vld [vmem:[#allocation7 + $0x1d0] sm:$0xff]
    %v440 = vld [vmem:[#allocation7 + $0x1d8] sm:$0xff]
    %v441 = vld [vmem:[#allocation7 + $0x1e0] sm:$0xff]
    %v442 = vld [vmem:[#allocation7 + $0x1e8] sm:$0xff]
    %v443 = vld [vmem:[#allocation7 + $0x1f0] sm:$0xff]
    %v444 = vld [vmem:[#allocation7 + $0x1f8] sm:$0xff]
    %v445 = vld [vmem:[%s6] sm:$0xf]
    %v447 = vlaneseq
    %v448 = vshrl.u32 %v447, 7
    %v449 = vsub.s32 0, %v448
    %v450 = vrot.slane %v445, %v449
    %v451 = vlaneseq
    %v452 = vshrl.u32 %v451, 7
    %v453 = vsub.s32 1, %v452
    %v454 = vrot.slane %v445, %v453
    %v455 = vlaneseq
    %v456 = vshrl.u32 %v455, 7
    %v457 = vsub.s32 2, %v456
    %v458 = vrot.slane %v445, %v457
    %v459 = vlaneseq
    %v460 = vshrl.u32 %v459, 7
    %v461 = vsub.s32 3, %v460
    %v462 = vrot.slane %v445, %v461
    %v531 = vunpack.c.l.b16 %v381
    %v532 = vunpack.c.h.b16 %v381
    %v533 = vunpack.c.l.b16 %v382
    %v534 = vunpack.c.h.b16 %v382
    %v535 = vunpack.c.l.b16 %v383
    %v536 = vunpack.c.h.b16 %v383
    %v537 = vunpack.c.l.b16 %v384
    %v538 = vunpack.c.h.b16 %v384
    %v539 = vunpack.c.l.b16 %v385
    %v540 = vunpack.c.h.b16 %v385
    %v541 = vunpack.c.l.b16 %v386
    %v542 = vunpack.c.h.b16 %v386
    %v543 = vunpack.c.l.b16 %v387
    %v544 = vunpack.c.h.b16 %v387
    %v545 = vunpack.c.l.b16 %v388
    %v546 = vunpack.c.h.b16 %v388
    %v547 = vunpack.c.l.b16 %v389
    %v548 = vunpack.c.h.b16 %v389
    %v549 = vunpack.c.l.b16 %v390
    %v550 = vunpack.c.h.b16 %v390
    %v551 = vunpack.c.l.b16 %v391
    %v552 = vunpack.c.h.b16 %v391
    %v553 = vunpack.c.l.b16 %v392
    %v554 = vunpack.c.h.b16 %v392
    %v555 = vunpack.c.l.b16 %v393
    %v556 = vunpack.c.h.b16 %v393
    %v557 = vunpack.c.l.b16 %v394
    %v558 = vunpack.c.h.b16 %v394
    %v559 = vunpack.c.l.b16 %v395
    %v560 = vunpack.c.h.b16 %v395
    %v561 = vunpack.c.l.b16 %v396
    %v562 = vunpack.c.h.b16 %v396
    %v563 = vunpack.c.l.b16 %v397
    %v564 = vunpack.c.h.b16 %v397
    %v565 = vunpack.c.l.b16 %v398
    %v566 = vunpack.c.h.b16 %v398
    %v567 = vunpack.c.l.b16 %v399
    %v568 = vunpack.c.h.b16 %v399
    %v569 = vunpack.c.l.b16 %v400
    %v570 = vunpack.c.h.b16 %v400
    %v571 = vunpack.c.l.b16 %v401
    %v572 = vunpack.c.h.b16 %v401
    %v573 = vunpack.c.l.b16 %v402
    %v574 = vunpack.c.h.b16 %v402
    %v575 = vunpack.c.l.b16 %v403
    %v576 = vunpack.c.h.b16 %v403
    %v577 = vunpack.c.l.b16 %v404
    %v578 = vunpack.c.h.b16 %v404
    %v579 = vunpack.c.l.b16 %v405
    %v580 = vunpack.c.h.b16 %v405
    %v581 = vunpack.c.l.b16 %v406
    %v582 = vunpack.c.h.b16 %v406
    %v583 = vunpack.c.l.b16 %v407
    %v584 = vunpack.c.h.b16 %v407
    %v585 = vunpack.c.l.b16 %v408
    %v586 = vunpack.c.h.b16 %v408
    %v587 = vunpack.c.l.b16 %v409
    %v588 = vunpack.c.h.b16 %v409
    %v589 = vunpack.c.l.b16 %v410
    %v590 = vunpack.c.h.b16 %v410
    %v591 = vunpack.c.l.b16 %v411
    %v592 = vunpack.c.h.b16 %v411
    %v593 = vunpack.c.l.b16 %v412
    %v594 = vunpack.c.h.b16 %v412
    %v595 = vunpack.c.l.b16 %v413
    %v596 = vunpack.c.h.b16 %v413
    %v597 = vunpack.c.l.b16 %v414
    %v598 = vunpack.c.h.b16 %v414
    %v599 = vunpack.c.l.b16 %v415
    %v600 = vunpack.c.h.b16 %v415
    %v601 = vunpack.c.l.b16 %v416
    %v602 = vunpack.c.h.b16 %v416
    %v603 = vunpack.c.l.b16 %v417
    %v604 = vunpack.c.h.b16 %v417
    %v605 = vunpack.c.l.b16 %v418
    %v606 = vunpack.c.h.b16 %v418
    %v607 = vunpack.c.l.b16 %v419
    %v608 = vunpack.c.h.b16 %v419
    %v609 = vunpack.c.l.b16 %v420
    %v610 = vunpack.c.h.b16 %v420
    %v611 = vunpack.c.l.b16 %v421
    %v612 = vunpack.c.h.b16 %v421
    %v613 = vunpack.c.l.b16 %v422
    %v614 = vunpack.c.h.b16 %v422
    %v615 = vunpack.c.l.b16 %v423
    %v616 = vunpack.c.h.b16 %v423
    %v617 = vunpack.c.l.b16 %v424
    %v618 = vunpack.c.h.b16 %v424
    %v619 = vunpack.c.l.b16 %v425
    %v620 = vunpack.c.h.b16 %v425
    %v621 = vunpack.c.l.b16 %v426
    %v622 = vunpack.c.h.b16 %v426
    %v623 = vunpack.c.l.b16 %v427
    %v624 = vunpack.c.h.b16 %v427
    %v625 = vunpack.c.l.b16 %v428
    %v626 = vunpack.c.h.b16 %v428
    %v627 = vunpack.c.l.b16 %v429
    %v628 = vunpack.c.h.b16 %v429
    %v629 = vunpack.c.l.b16 %v430
    %v630 = vunpack.c.h.b16 %v430
    %v631 = vunpack.c.l.b16 %v431
    %v632 = vunpack.c.h.b16 %v431
    %v633 = vunpack.c.l.b16 %v432
    %v634 = vunpack.c.h.b16 %v432
    %v635 = vunpack.c.l.b16 %v433
    %v636 = vunpack.c.h.b16 %v433
    %v637 = vunpack.c.l.b16 %v434
    %v638 = vunpack.c.h.b16 %v434
    %v639 = vunpack.c.l.b16 %v435
    %v640 = vunpack.c.h.b16 %v435
    %v641 = vunpack.c.l.b16 %v436
    %v642 = vunpack.c.h.b16 %v436
    %v643 = vunpack.c.l.b16 %v437
    %v644 = vunpack.c.h.b16 %v437
    %v645 = vunpack.c.l.b16 %v438
    %v646 = vunpack.c.h.b16 %v438
    %v647 = vunpack.c.l.b16 %v439
    %v648 = vunpack.c.h.b16 %v439
    %v649 = vunpack.c.l.b16 %v440
    %v650 = vunpack.c.h.b16 %v440
    %v651 = vunpack.c.l.b16 %v441
    %v652 = vunpack.c.h.b16 %v441
    %v653 = vunpack.c.l.b16 %v442
    %v654 = vunpack.c.h.b16 %v442
    %v655 = vunpack.c.l.b16 %v443
    %v656 = vunpack.c.h.b16 %v443
    %v657 = vunpack.c.l.b16 %v444
    %v658 = vunpack.c.h.b16 %v444
    %v659 = vpack.c.b16 %v535, %v531
    %v660 = vpack.c.b16 %v536, %v532
    %v661 = vpack.c.b16 %v537, %v533
    %v662 = vpack.c.b16 %v538, %v534
    %v663 = vpack.c.b16 %v543, %v539
    %v664 = vpack.c.b16 %v544, %v540
    %v665 = vpack.c.b16 %v545, %v541
    %v666 = vpack.c.b16 %v546, %v542
    %v667 = vpack.c.b16 %v551, %v547
    %v668 = vpack.c.b16 %v552, %v548
    %v669 = vpack.c.b16 %v553, %v549
    %v670 = vpack.c.b16 %v554, %v550
    %v671 = vpack.c.b16 %v559, %v555
    %v672 = vpack.c.b16 %v560, %v556
    %v673 = vpack.c.b16 %v561, %v557
    %v674 = vpack.c.b16 %v562, %v558
    %v675 = vpack.c.b16 %v567, %v563
    %v676 = vpack.c.b16 %v568, %v564
    %v677 = vpack.c.b16 %v569, %v565
    %v678 = vpack.c.b16 %v570, %v566
    %v679 = vpack.c.b16 %v575, %v571
    %v680 = vpack.c.b16 %v576, %v572
    %v681 = vpack.c.b16 %v577, %v573
    %v682 = vpack.c.b16 %v578, %v574
    %v683 = vpack.c.b16 %v583, %v579
    %v684 = vpack.c.b16 %v584, %v580
    %v685 = vpack.c.b16 %v585, %v581
    %v686 = vpack.c.b16 %v586, %v582
    %v687 = vpack.c.b16 %v591, %v587
    %v688 = vpack.c.b16 %v592, %v588
    %v689 = vpack.c.b16 %v593, %v589
    %v690 = vpack.c.b16 %v594, %v590
    %v691 = vpack.c.b16 %v599, %v595
    %v692 = vpack.c.b16 %v600, %v596
    %v693 = vpack.c.b16 %v601, %v597
    %v694 = vpack.c.b16 %v602, %v598
    %v695 = vpack.c.b16 %v607, %v603
    %v696 = vpack.c.b16 %v608, %v604
    %v697 = vpack.c.b16 %v609, %v605
    %v698 = vpack.c.b16 %v610, %v606
    %v699 = vpack.c.b16 %v615, %v611
    %v700 = vpack.c.b16 %v616, %v612
    %v701 = vpack.c.b16 %v617, %v613
    %v702 = vpack.c.b16 %v618, %v614
    %v703 = vpack.c.b16 %v623, %v619
    %v704 = vpack.c.b16 %v624, %v620
    %v705 = vpack.c.b16 %v625, %v621
    %v706 = vpack.c.b16 %v626, %v622
    %v707 = vpack.c.b16 %v631, %v627
    %v708 = vpack.c.b16 %v632, %v628
    %v709 = vpack.c.b16 %v633, %v629
    %v710 = vpack.c.b16 %v634, %v630
    %v711 = vpack.c.b16 %v639, %v635
    %v712 = vpack.c.b16 %v640, %v636
    %v713 = vpack.c.b16 %v641, %v637
    %v714 = vpack.c.b16 %v642, %v638
    %v715 = vpack.c.b16 %v647, %v643
    %v716 = vpack.c.b16 %v648, %v644
    %v717 = vpack.c.b16 %v649, %v645
    %v718 = vpack.c.b16 %v650, %v646
    %v719 = vpack.c.b16 %v655, %v651
    %v720 = vpack.c.b16 %v656, %v652
    %v721 = vpack.c.b16 %v657, %v653
    %v722 = vpack.c.b16 %v658, %v654
    %787 = vmatprep.subr.bf16.mxu0 %v660
    %788 = vmatpush1.bf16.msra.mxu0 %v659
    %789 = vmatprep.subr.bf16.mxu0 %v664
    %790 = vmatpush1.bf16.msra.mxu0 %v663
    %791 = vmatprep.subr.bf16.mxu0 %v668
    %792 = vmatpush1.bf16.msra.mxu0 %v667
    %793 = vmatprep.subr.bf16.mxu0 %v672
    %794 = vmatpush1.bf16.msra.mxu0 %v671
    %795 = vmatprep.subr.bf16.mxu0 %v676
    %796 = vmatpush1.bf16.msra.mxu0 %v675
    %797 = vmatprep.subr.bf16.mxu0 %v680
    %798 = vmatpush1.bf16.msra.mxu0 %v679
    %799 = vmatprep.subr.bf16.mxu0 %v684
    %800 = vmatpush1.bf16.msra.mxu0 %v683
    %801 = vmatprep.subr.bf16.mxu0 %v688
    %802 = vmatpush1.bf16.msra.mxu0 %v687
    %803 = vmatprep.subr.bf16.mxu0 %v692
    %804 = vmatpush1.bf16.msra.mxu0 %v691
    %805 = vmatprep.subr.bf16.mxu0 %v696
    %806 = vmatpush1.bf16.msra.mxu0 %v695
    %807 = vmatprep.subr.bf16.mxu0 %v700
    %808 = vmatpush1.bf16.msra.mxu0 %v699
    %809 = vmatprep.subr.bf16.mxu0 %v704
    %810 = vmatpush1.bf16.msra.mxu0 %v703
    %811 = vmatprep.subr.bf16.mxu0 %v708
    %812 = vmatpush1.bf16.msra.mxu0 %v707
    %813 = vmatprep.subr.bf16.mxu0 %v712
    %814 = vmatpush1.bf16.msra.mxu0 %v711
    %815 = vmatprep.subr.bf16.mxu0 %v716
    %816 = vmatpush1.bf16.msra.mxu0 %v715
    %817 = vmatprep.subr.bf16.mxu0 %v720
    %818 = vmatpush1.bf16.msra.mxu0 %v719
    %819 = vmatprep.mubr.bf16.mxu0 %v380
    %820 = vmatmul.mubr.bf16.gmra.mrb[0].mxu0 %v379
    %v821 = vpop.f32.mrb[0].mxu0
    %v822 = vadd.f32 %v450, %v821
    %v823 = vpop.f32.mrb[0].mxu0
    %v824 = vadd.f32 %v454, %v823
    %v825 = vpop.f32.mrb[0].mxu0
    %v826 = vadd.f32 %v450, %v825
    %v827 = vpop.f32.mrb[0].mxu0
    %v828 = vadd.f32 %v454, %v827
    %829 = vdwg.mxu0
    %830 = vmatprep.subr.bf16.mxu0 %v662
    %831 = vmatpush1.bf16.msra.mxu0 %v661
    %832 = vmatprep.subr.bf16.mxu0 %v666
    %833 = vmatpush1.bf16.msra.mxu0 %v665
    %834 = vmatprep.subr.bf16.mxu0 %v670
    %835 = vmatpush1.bf16.msra.mxu0 %v669
    %836 = vmatprep.subr.bf16.mxu0 %v674
    %837 = vmatpush1.bf16.msra.mxu0 %v673
    %838 = vmatprep.subr.bf16.mxu0 %v678
    %839 = vmatpush1.bf16.msra.mxu0 %v677
    %840 = vmatprep.subr.bf16.mxu0 %v682
    %841 = vmatpush1.bf16.msra.mxu0 %v681
    %842 = vmatprep.subr.bf16.mxu0 %v686
    %843 = vmatpush1.bf16.msra.mxu0 %v685
    %844 = vmatprep.subr.bf16.mxu0 %v690
    %845 = vmatpush1.bf16.msra.mxu0 %v689
    %846 = vmatprep.subr.bf16.mxu0 %v694
    %847 = vmatpush1.bf16.msra.mxu0 %v693
    %848 = vmatprep.subr.bf16.mxu0 %v698
    %849 = vmatpush1.bf16.msra.mxu0 %v697
    %850 = vmatprep.subr.bf16.mxu0 %v702
    %851 = vmatpush1.bf16.msra.mxu0 %v701
    %852 = vmatprep.subr.bf16.mxu0 %v706
    %853 = vmatpush1.bf16.msra.mxu0 %v705
    %854 = vmatprep.subr.bf16.mxu0 %v710
    %855 = vmatpush1.bf16.msra.mxu0 %v709
    %856 = vmatprep.subr.bf16.mxu0 %v714
    %857 = vmatpush1.bf16.msra.mxu0 %v713
    %858 = vmatprep.subr.bf16.mxu0 %v718
    %859 = vmatpush1.bf16.msra.mxu0 %v717
    %860 = vmatprep.subr.bf16.mxu0 %v722
    %861 = vmatpush1.bf16.msra.mxu0 %v721
    %862 = vmatprep.mubr.bf16.mxu0 %v380
    %863 = vmatmul.mubr.bf16.gmra.mrb[0].mxu0 %v379
    %v864 = vpop.f32.mrb[0].mxu0
    %v865 = vadd.f32 %v458, %v864
    %v866 = vpop.f32.mrb[0].mxu0
    %v867 = vadd.f32 %v462, %v866
    %v868 = vpop.f32.mrb[0].mxu0
    %v869 = vadd.f32 %v458, %v868
    %v870 = vpop.f32.mrb[0].mxu0
    %v871 = vadd.f32 %v462, %v870
    %872 = vdwg.mxu0
    %vm873 = vcmp.gt.f32.partialorder %v822, 0.0
    %vm874 = vcmp.gt.f32.partialorder %v824, 0.0
    %vm875 = vcmp.gt.f32.partialorder %v865, 0.0
    %vm876 = vcmp.gt.f32.partialorder %v867, 0.0
    %vm877 = vcmp.gt.f32.partialorder %v826, 0.0
    %vm878 = vcmp.gt.f32.partialorder %v828, 0.0
    %vm879 = vcmp.gt.f32.partialorder %v869, 0.0
    %vm880 = vcmp.gt.f32.partialorder %v871, 0.0
    %v881 = vmul.f32 %v822, 0.2
    %v882 = vmul.f32 %v824, 0.2
    %v883 = vmul.f32 %v865, 0.2
    %v884 = vmul.f32 %v867, 0.2
    %v885 = vmul.f32 %v826, 0.2
    %v886 = vmul.f32 %v828, 0.2
    %v887 = vmul.f32 %v869, 0.2
    %v888 = vmul.f32 %v871, 0.2
    %v889 = vsel %vm873, %v822, %v881
    %v890 = vsel %vm874, %v824, %v882
    %v891 = vsel %vm875, %v865, %v883
    %v892 = vsel %vm876, %v867, %v884
    %v893 = vsel %vm877, %v826, %v885
    %v894 = vsel %vm878, %v828, %v886
    %v895 = vsel %vm879, %v869, %v887
    %v896 = vsel %vm880, %v871, %v888
    %v897 = vpack.c.bf16 %v893, %v889
    %v898 = vpack.c.bf16 %v894, %v890
    %v899 = vpack.c.bf16 %v895, %v891
    %v900 = vpack.c.bf16 %v896, %v892
    %v901 = vld [vmem:[#allocation8] sm:$0xff]
    %v902 = vld [vmem:[#allocation8 + $0x8] sm:$0xff]
    %v903 = vld [vmem:[#allocation8 + $0x10] sm:$0xff]
    %v904 = vld [vmem:[#allocation8 + $0x18] sm:$0xff]
    %v905 = vld [vmem:[#allocation8 + $0x20] sm:$0xff]
    %v906 = vld [vmem:[#allocation8 + $0x28] sm:$0xff]
    %v907 = vld [vmem:[#allocation8 + $0x30] sm:$0xff]
    %v908 = vld [vmem:[#allocation8 + $0x38] sm:$0xff]
    %v909 = vld [vmem:[#allocation8 + $0x40] sm:$0xff]
    %v910 = vld [vmem:[#allocation8 + $0x48] sm:$0xff]
    %v911 = vld [vmem:[#allocation8 + $0x50] sm:$0xff]
    %v912 = vld [vmem:[#allocation8 + $0x58] sm:$0xff]
    %v913 = vld [vmem:[#allocation8 + $0x60] sm:$0xff]
    %v914 = vld [vmem:[#allocation8 + $0x68] sm:$0xff]
    %v915 = vld [vmem:[#allocation8 + $0x70] sm:$0xff]
    %v916 = vld [vmem:[#allocation8 + $0x78] sm:$0xff]
    %v917 = vld [vmem:[#allocation8 + $0x80] sm:$0xff]
    %v918 = vld [vmem:[#allocation8 + $0x88] sm:$0xff]
    %v919 = vld [vmem:[#allocation8 + $0x90] sm:$0xff]
    %v920 = vld [vmem:[#allocation8 + $0x98] sm:$0xff]
    %v921 = vld [vmem:[#allocation8 + $0xa0] sm:$0xff]
    %v922 = vld [vmem:[#allocation8 + $0xa8] sm:$0xff]
    %v923 = vld [vmem:[#allocation8 + $0xb0] sm:$0xff]
    %v924 = vld [vmem:[#allocation8 + $0xb8] sm:$0xff]
    %v925 = vld [vmem:[#allocation8 + $0xc0] sm:$0xff]
    %v926 = vld [vmem:[#allocation8 + $0xc8] sm:$0xff]
    %v927 = vld [vmem:[#allocation8 + $0xd0] sm:$0xff]
    %v928 = vld [vmem:[#allocation8 + $0xd8] sm:$0xff]
    %v929 = vld [vmem:[#allocation8 + $0xe0] sm:$0xff]
    %v930 = vld [vmem:[#allocation8 + $0xe8] sm:$0xff]
    %v931 = vld [vmem:[#allocation8 + $0xf0] sm:$0xff]
    %v932 = vld [vmem:[#allocation8 + $0xf8] sm:$0xff]
    %v933 = vld [vmem:[#allocation8 + $0x100] sm:$0xff]
    %v934 = vld [vmem:[#allocation8 + $0x108] sm:$0xff]
    %v935 = vld [vmem:[#allocation8 + $0x110] sm:$0xff]
    %v936 = vld [vmem:[#allocation8 + $0x118] sm:$0xff]
    %v937 = vld [vmem:[#allocation8 + $0x120] sm:$0xff]
    %v938 = vld [vmem:[#allocation8 + $0x128] sm:$0xff]
    %v939 = vld [vmem:[#allocation8 + $0x130] sm:$0xff]
    %v940 = vld [vmem:[#allocation8 + $0x138] sm:$0xff]
    %v941 = vld [vmem:[#allocation8 + $0x140] sm:$0xff]
    %v942 = vld [vmem:[#allocation8 + $0x148] sm:$0xff]
    %v943 = vld [vmem:[#allocation8 + $0x150] sm:$0xff]
    %v944 = vld [vmem:[#allocation8 + $0x158] sm:$0xff]
    %v945 = vld [vmem:[#allocation8 + $0x160] sm:$0xff]
    %v946 = vld [vmem:[#allocation8 + $0x168] sm:$0xff]
    %v947 = vld [vmem:[#allocation8 + $0x170] sm:$0xff]
    %v948 = vld [vmem:[#allocation8 + $0x178] sm:$0xff]
    %v949 = vld [vmem:[#allocation8 + $0x180] sm:$0xff]
    %v950 = vld [vmem:[#allocation8 + $0x188] sm:$0xff]
    %v951 = vld [vmem:[#allocation8 + $0x190] sm:$0xff]
    %v952 = vld [vmem:[#allocation8 + $0x198] sm:$0xff]
    %v953 = vld [vmem:[#allocation8 + $0x1a0] sm:$0xff]
    %v954 = vld [vmem:[#allocation8 + $0x1a8] sm:$0xff]
    %v955 = vld [vmem:[#allocation8 + $0x1b0] sm:$0xff]
    %v956 = vld [vmem:[#allocation8 + $0x1b8] sm:$0xff]
    %v957 = vld [vmem:[#allocation8 + $0x1c0] sm:$0xff]
    %v958 = vld [vmem:[#allocation8 + $0x1c8] sm:$0xff]
    %v959 = vld [vmem:[#allocation8 + $0x1d0] sm:$0xff]
    %v960 = vld [vmem:[#allocation8 + $0x1d8] sm:$0xff]
    %v961 = vld [vmem:[#allocation8 + $0x1e0] sm:$0xff]
    %v962 = vld [vmem:[#allocation8 + $0x1e8] sm:$0xff]
    %v963 = vld [vmem:[#allocation8 + $0x1f0] sm:$0xff]
    %v964 = vld [vmem:[#allocation8 + $0x1f8] sm:$0xff]
    %v965 = vld [vmem:[%s8] sm:$0x3]
    %v967 = vlaneseq
    %v968 = vshrl.u32 %v967, 7
    %v969 = vsub.s32 0, %v968
    %v970 = vrot.slane %v965, %v969
    %v971 = vlaneseq
    %v972 = vshrl.u32 %v971, 7
    %v973 = vsub.s32 1, %v972
    %v974 = vrot.slane %v965, %v973
    %v1041 = vunpack.c.l.b16 %v901
    %v1042 = vunpack.c.h.b16 %v901
    %v1043 = vunpack.c.l.b16 %v902
    %v1044 = vunpack.c.h.b16 %v902
    %v1045 = vunpack.c.l.b16 %v903
    %v1046 = vunpack.c.h.b16 %v903
    %v1047 = vunpack.c.l.b16 %v904
    %v1048 = vunpack.c.h.b16 %v904
    %v1049 = vunpack.c.l.b16 %v905
    %v1050 = vunpack.c.h.b16 %v905
    %v1051 = vunpack.c.l.b16 %v906
    %v1052 = vunpack.c.h.b16 %v906
    %v1053 = vunpack.c.l.b16 %v907
    %v1054 = vunpack.c.h.b16 %v907
    %v1055 = vunpack.c.l.b16 %v908
    %v1056 = vunpack.c.h.b16 %v908
    %v1057 = vunpack.c.l.b16 %v909
    %v1058 = vunpack.c.h.b16 %v909
    %v1059 = vunpack.c.l.b16 %v910
    %v1060 = vunpack.c.h.b16 %v910
    %v1061 = vunpack.c.l.b16 %v911
    %v1062 = vunpack.c.h.b16 %v911
    %v1063 = vunpack.c.l.b16 %v912
    %v1064 = vunpack.c.h.b16 %v912
    %v1065 = vunpack.c.l.b16 %v913
    %v1066 = vunpack.c.h.b16 %v913
    %v1067 = vunpack.c.l.b16 %v914
    %v1068 = vunpack.c.h.b16 %v914
    %v1069 = vunpack.c.l.b16 %v915
    %v1070 = vunpack.c.h.b16 %v915
    %v1071 = vunpack.c.l.b16 %v916
    %v1072 = vunpack.c.h.b16 %v916
    %v1073 = vunpack.c.l.b16 %v917
    %v1074 = vunpack.c.h.b16 %v917
    %v1075 = vunpack.c.l.b16 %v918
    %v1076 = vunpack.c.h.b16 %v918
    %v1077 = vunpack.c.l.b16 %v919
    %v1078 = vunpack.c.h.b16 %v919
    %v1079 = vunpack.c.l.b16 %v920
    %v1080 = vunpack.c.h.b16 %v920
    %v1081 = vunpack.c.l.b16 %v921
    %v1082 = vunpack.c.h.b16 %v921
    %v1083 = vunpack.c.l.b16 %v922
    %v1084 = vunpack.c.h.b16 %v922
    %v1085 = vunpack.c.l.b16 %v923
    %v1086 = vunpack.c.h.b16 %v923
    %v1087 = vunpack.c.l.b16 %v924
    %v1088 = vunpack.c.h.b16 %v924
    %v1089 = vunpack.c.l.b16 %v925
    %v1090 = vunpack.c.h.b16 %v925
    %v1091 = vunpack.c.l.b16 %v926
    %v1092 = vunpack.c.h.b16 %v926
    %v1093 = vunpack.c.l.b16 %v927
    %v1094 = vunpack.c.h.b16 %v927
    %v1095 = vunpack.c.l.b16 %v928
    %v1096 = vunpack.c.h.b16 %v928
    %v1097 = vunpack.c.l.b16 %v929
    %v1098 = vunpack.c.h.b16 %v929
    %v1099 = vunpack.c.l.b16 %v930
    %v1100 = vunpack.c.h.b16 %v930
    %v1101 = vunpack.c.l.b16 %v931
    %v1102 = vunpack.c.h.b16 %v931
    %v1103 = vunpack.c.l.b16 %v932
    %v1104 = vunpack.c.h.b16 %v932
    %v1105 = vunpack.c.l.b16 %v933
    %v1106 = vunpack.c.h.b16 %v933
    %v1107 = vunpack.c.l.b16 %v934
    %v1108 = vunpack.c.h.b16 %v934
    %v1109 = vunpack.c.l.b16 %v935
    %v1110 = vunpack.c.h.b16 %v935
    %v1111 = vunpack.c.l.b16 %v936
    %v1112 = vunpack.c.h.b16 %v936
    %v1113 = vunpack.c.l.b16 %v937
    %v1114 = vunpack.c.h.b16 %v937
    %v1115 = vunpack.c.l.b16 %v938
    %v1116 = vunpack.c.h.b16 %v938
    %v1117 = vunpack.c.l.b16 %v939
    %v1118 = vunpack.c.h.b16 %v939
    %v1119 = vunpack.c.l.b16 %v940
    %v1120 = vunpack.c.h.b16 %v940
    %v1121 = vunpack.c.l.b16 %v941
    %v1122 = vunpack.c.h.b16 %v941
    %v1123 = vunpack.c.l.b16 %v942
    %v1124 = vunpack.c.h.b16 %v942
    %v1125 = vunpack.c.l.b16 %v943
    %v1126 = vunpack.c.h.b16 %v943
    %v1127 = vunpack.c.l.b16 %v944
    %v1128 = vunpack.c.h.b16 %v944
    %v1129 = vunpack.c.l.b16 %v945
    %v1130 = vunpack.c.h.b16 %v945
    %v1131 = vunpack.c.l.b16 %v946
    %v1132 = vunpack.c.h.b16 %v946
    %v1133 = vunpack.c.l.b16 %v947
    %v1134 = vunpack.c.h.b16 %v947
    %v1135 = vunpack.c.l.b16 %v948
    %v1136 = vunpack.c.h.b16 %v948
    %v1137 = vunpack.c.l.b16 %v949
    %v1138 = vunpack.c.h.b16 %v949
    %v1139 = vunpack.c.l.b16 %v950
    %v1140 = vunpack.c.h.b16 %v950
    %v1141 = vunpack.c.l.b16 %v951
    %v1142 = vunpack.c.h.b16 %v951
    %v1143 = vunpack.c.l.b16 %v952
    %v1144 = vunpack.c.h.b16 %v952
    %v1145 = vunpack.c.l.b16 %v953
    %v1146 = vunpack.c.h.b16 %v953
    %v1147 = vunpack.c.l.b16 %v954
    %v1148 = vunpack.c.h.b16 %v954
    %v1149 = vunpack.c.l.b16 %v955
    %v1150 = vunpack.c.h.b16 %v955
    %v1151 = vunpack.c.l.b16 %v956
    %v1152 = vunpack.c.h.b16 %v956
    %v1153 = vunpack.c.l.b16 %v957
    %v1154 = vunpack.c.h.b16 %v957
    %v1155 = vunpack.c.l.b16 %v958
    %v1156 = vunpack.c.h.b16 %v958
    %v1157 = vunpack.c.l.b16 %v959
    %v1158 = vunpack.c.h.b16 %v959
    %v1159 = vunpack.c.l.b16 %v960
    %v1160 = vunpack.c.h.b16 %v960
    %v1161 = vunpack.c.l.b16 %v961
    %v1162 = vunpack.c.h.b16 %v961
    %v1163 = vunpack.c.l.b16 %v962
    %v1164 = vunpack.c.h.b16 %v962
    %v1165 = vunpack.c.l.b16 %v963
    %v1166 = vunpack.c.h.b16 %v963
    %v1167 = vunpack.c.l.b16 %v964
    %v1168 = vunpack.c.h.b16 %v964
    %v1169 = vpack.c.b16 %v1043, %v1041
    %v1170 = vpack.c.b16 %v1044, %v1042
    %v1171 = vpack.c.b16 %v1047, %v1045
    %v1172 = vpack.c.b16 %v1048, %v1046
    %v1173 = vpack.c.b16 %v1051, %v1049
    %v1174 = vpack.c.b16 %v1052, %v1050
    %v1175 = vpack.c.b16 %v1055, %v1053
    %v1176 = vpack.c.b16 %v1056, %v1054
    %v1177 = vpack.c.b16 %v1059, %v1057
    %v1178 = vpack.c.b16 %v1060, %v1058
    %v1179 = vpack.c.b16 %v1063, %v1061
    %v1180 = vpack.c.b16 %v1064, %v1062
    %v1181 = vpack.c.b16 %v1067, %v1065
    %v1182 = vpack.c.b16 %v1068, %v1066
    %v1183 = vpack.c.b16 %v1071, %v1069
    %v1184 = vpack.c.b16 %v1072, %v1070
    %v1185 = vpack.c.b16 %v1075, %v1073
    %v1186 = vpack.c.b16 %v1076, %v1074
    %v1187 = vpack.c.b16 %v1079, %v1077
    %v1188 = vpack.c.b16 %v1080, %v1078
    %v1189 = vpack.c.b16 %v1083, %v1081
    %v1190 = vpack.c.b16 %v1084, %v1082
    %v1191 = vpack.c.b16 %v1087, %v1085
    %v1192 = vpack.c.b16 %v1088, %v1086
    %v1193 = vpack.c.b16 %v1091, %v1089
    %v1194 = vpack.c.b16 %v1092, %v1090
    %v1195 = vpack.c.b16 %v1095, %v1093
    %v1196 = vpack.c.b16 %v1096, %v1094
    %v1197 = vpack.c.b16 %v1099, %v1097
    %v1198 = vpack.c.b16 %v1100, %v1098
    %v1199 = vpack.c.b16 %v1103, %v1101
    %v1200 = vpack.c.b16 %v1104, %v1102
    %v1201 = vpack.c.b16 %v1107, %v1105
    %v1202 = vpack.c.b16 %v1108, %v1106
    %v1203 = vpack.c.b16 %v1111, %v1109
    %v1204 = vpack.c.b16 %v1112, %v1110
    %v1205 = vpack.c.b16 %v1115, %v1113
    %v1206 = vpack.c.b16 %v1116, %v1114
    %v1207 = vpack.c.b16 %v1119, %v1117
    %v1208 = vpack.c.b16 %v1120, %v1118
    %v1209 = vpack.c.b16 %v1123, %v1121
    %v1210 = vpack.c.b16 %v1124, %v1122
    %v1211 = vpack.c.b16 %v1127, %v1125
    %v1212 = vpack.c.b16 %v1128, %v1126
    %v1213 = vpack.c.b16 %v1131, %v1129
    %v1214 = vpack.c.b16 %v1132, %v1130
    %v1215 = vpack.c.b16 %v1135, %v1133
    %v1216 = vpack.c.b16 %v1136, %v1134
    %v1217 = vpack.c.b16 %v1139, %v1137
    %v1218 = vpack.c.b16 %v1140, %v1138
    %v1219 = vpack.c.b16 %v1143, %v1141
    %v1220 = vpack.c.b16 %v1144, %v1142
    %v1221 = vpack.c.b16 %v1147, %v1145
    %v1222 = vpack.c.b16 %v1148, %v1146
    %v1223 = vpack.c.b16 %v1151, %v1149
    %v1224 = vpack.c.b16 %v1152, %v1150
    %v1225 = vpack.c.b16 %v1155, %v1153
    %v1226 = vpack.c.b16 %v1156, %v1154
    %v1227 = vpack.c.b16 %v1159, %v1157
    %v1228 = vpack.c.b16 %v1160, %v1158
    %v1229 = vpack.c.b16 %v1163, %v1161
    %v1230 = vpack.c.b16 %v1164, %v1162
    %v1231 = vpack.c.b16 %v1167, %v1165
    %v1232 = vpack.c.b16 %v1168, %v1166
    %1297 = vmatprep.subr.bf16.mxu0 %v1170
    %1298 = vmatpush1.bf16.msra.mxu0 %v1169
    %1299 = vmatprep.subr.bf16.mxu0 %v1172
    %1300 = vmatpush1.bf16.msra.mxu0 %v1171
    %1301 = vmatprep.subr.bf16.mxu0 %v1174
    %1302 = vmatpush1.bf16.msra.mxu0 %v1173
    %1303 = vmatprep.subr.bf16.mxu0 %v1176
    %1304 = vmatpush1.bf16.msra.mxu0 %v1175
    %1305 = vmatprep.subr.bf16.mxu0 %v1178
    %1306 = vmatpush1.bf16.msra.mxu0 %v1177
    %1307 = vmatprep.subr.bf16.mxu0 %v1180
    %1308 = vmatpush1.bf16.msra.mxu0 %v1179
    %1309 = vmatprep.subr.bf16.mxu0 %v1182
    %1310 = vmatpush1.bf16.msra.mxu0 %v1181
    %1311 = vmatprep.subr.bf16.mxu0 %v1184
    %1312 = vmatpush1.bf16.msra.mxu0 %v1183
    %1313 = vmatprep.subr.bf16.mxu0 %v1186
    %1314 = vmatpush1.bf16.msra.mxu0 %v1185
    %1315 = vmatprep.subr.bf16.mxu0 %v1188
    %1316 = vmatpush1.bf16.msra.mxu0 %v1187
    %1317 = vmatprep.subr.bf16.mxu0 %v1190
    %1318 = vmatpush1.bf16.msra.mxu0 %v1189
    %1319 = vmatprep.subr.bf16.mxu0 %v1192
    %1320 = vmatpush1.bf16.msra.mxu0 %v1191
    %1321 = vmatprep.subr.bf16.mxu0 %v1194
    %1322 = vmatpush1.bf16.msra.mxu0 %v1193
    %1323 = vmatprep.subr.bf16.mxu0 %v1196
    %1324 = vmatpush1.bf16.msra.mxu0 %v1195
    %1325 = vmatprep.subr.bf16.mxu0 %v1198
    %1326 = vmatpush1.bf16.msra.mxu0 %v1197
    %1327 = vmatprep.subr.bf16.mxu0 %v1200
    %1328 = vmatpush1.bf16.msra.mxu0 %v1199
    %1329 = vmatprep.mubr.bf16.mxu0 %v898
    %1330 = vmatmul.mubr.bf16.gmra.mrb[0].mxu0 %v897
    %v1331 = vpop.f32.mrb[0].mxu0
    %v1332 = vadd.f32 %v970, %v1331
    %v1333 = vpop.f32.mrb[0].mxu0
    %v1334 = vadd.f32 %v974, %v1333
    %v1335 = vpop.f32.mrb[0].mxu0
    %v1336 = vadd.f32 %v970, %v1335
    %v1337 = vpop.f32.mrb[0].mxu0
    %v1338 = vadd.f32 %v974, %v1337
    %1339 = vdwg.mxu0
    %1340 = vmatprep.subr.bf16.mxu0 %v1202
    %1341 = vmatpush1.bf16.msra.mxu0 %v1201
    %1342 = vmatprep.subr.bf16.mxu0 %v1204
    %1343 = vmatpush1.bf16.msra.mxu0 %v1203
    %1344 = vmatprep.subr.bf16.mxu0 %v1206
    %1345 = vmatpush1.bf16.msra.mxu0 %v1205
    %1346 = vmatprep.subr.bf16.mxu0 %v1208
    %1347 = vmatpush1.bf16.msra.mxu0 %v1207
    %1348 = vmatprep.subr.bf16.mxu0 %v1210
    %1349 = vmatpush1.bf16.msra.mxu0 %v1209
    %1350 = vmatprep.subr.bf16.mxu0 %v1212
    %1351 = vmatpush1.bf16.msra.mxu0 %v1211
    %1352 = vmatprep.subr.bf16.mxu0 %v1214
    %1353 = vmatpush1.bf16.msra.mxu0 %v1213
    %1354 = vmatprep.subr.bf16.mxu0 %v1216
    %1355 = vmatpush1.bf16.msra.mxu0 %v1215
    %1356 = vmatprep.subr.bf16.mxu0 %v1218
    %1357 = vmatpush1.bf16.msra.mxu0 %v1217
    %1358 = vmatprep.subr.bf16.mxu0 %v1220
    %1359 = vmatpush1.bf16.msra.mxu0 %v1219
    %1360 = vmatprep.subr.bf16.mxu0 %v1222
    %1361 = vmatpush1.bf16.msra.mxu0 %v1221
    %1362 = vmatprep.subr.bf16.mxu0 %v1224
    %1363 = vmatpush1.bf16.msra.mxu0 %v1223
    %1364 = vmatprep.subr.bf16.mxu0 %v1226
    %1365 = vmatpush1.bf16.msra.mxu0 %v1225
    %1366 = vmatprep.subr.bf16.mxu0 %v1228
    %1367 = vmatpush1.bf16.msra.mxu0 %v1227
    %1368 = vmatprep.subr.bf16.mxu0 %v1230
    %1369 = vmatpush1.bf16.msra.mxu0 %v1229
    %1370 = vmatprep.subr.bf16.mxu0 %v1232
    %1371 = vmatpush1.bf16.msra.mxu0 %v1231
    %1372 = vmatprep.mubr.bf16.mxu0 %v900
    %1373 = vmatmul.mubr.bf16.gmra.mrb[0].mxu0 %v899
    %v1374 = vpop.f32.mrb[0].mxu0
    %v1375 = vadd.f32 %v1332, %v1374
    %v1376 = vpop.f32.mrb[0].mxu0
    %v1377 = vadd.f32 %v1334, %v1376
    %v1378 = vpop.f32.mrb[0].mxu0
    %v1379 = vadd.f32 %v1336, %v1378
    %v1380 = vpop.f32.mrb[0].mxu0
    %v1381 = vadd.f32 %v1338, %v1380
    %1382 = vdwg.mxu0
    %v1383 = vtanh.pop %v1375
    %v1384 = vtanh.pop %v1377
    %v1385 = vtanh.pop %v1379
    %v1386 = vtanh.pop %v1381
    %1387 = vst [vmem:[#allocation10] sm:$0xff] %v1383
    %1388 = vst [vmem:[#allocation10 + $0x8] sm:$0xff] %v1384
    %1389 = vst [vmem:[#allocation10 + $0x10] sm:$0xff] %v1385
    %1390 = vst [vmem:[#allocation10 + $0x18] sm:$0xff] %v1386
    // Predicated region
    $region54: #{generator_forward.1} parent=1 // pred_check
      _
    $region55: #{generator_forward.1} parent=1 // pred_check_branch
      %1392 = sbr.rel (0) target = $region57
    $region56: #{generator_forward.1} parent=1 // pred_region
      %s1394 = ssub.s32 512, 512
      %1395 = vsyncadd [#allocation4], %s1394
      %s1396 = sshll.u32 [#allocation10], 4
      %s1397 = int_to_ptr.vmem [resolvable:$true] %s1396
      %1402 = dma.vmem_to_hbm [thread:$0]  %s1397, 512, %s9, [#allocation4], 256, 256, 16
    $region57: #{generator_forward.1} parent=1 // pred_fallthru
      _
    // Predicated region
    $region58: #{generator_forward.1} parent=1 // pred_check
      _
    $region59: #{generator_forward.1} parent=1 // pred_check_branch
      %1404 = sbr.rel (0) target = $region61
    $region60: #{generator_forward.1} parent=1 // pred_region
      %1405 = dma.done [#allocation4], 512
    $region61: #{generator_forward.1} parent=1 // pred_fallthru
      _
    %1406 = vsyncpa [#allocation3], 1
    %1407 = vsyncpa [#allocation6], 1
    %1408 = vsyncpa [#allocation9], 1
    %1409 = vsyncpa [#allocation4], 1

</llo_original>
